<compile_context>
chip_gen: v5e
topology: v5e:2x2
jax: 0.10.0
libtpu: 0.0.40
codegen_flags: <defaults>
</compile_context>

<pallas_src>
import functools

import jax
import jax.numpy as jnp
from jax.experimental import pallas as pl
from jax.experimental.pallas import tpu as pltpu


def _round_up(x, m):
    return ((x + m - 1) // m) * m


def _vmem_capacity_bytes():
    try:
        return int(pltpu.get_tpu_info().vmem_capacity_bytes)
    except Exception:
        return 64 * 1024 * 1024  # conservative (v7x-sized)


def _rmsnorm_kernel(x_ref, w_ref, o_ref, *, eps, hidden):
    """One (block_rows, hidden) tile: row-local lane reduce, scale, store."""
    x = x_ref[...]                                         # (tm, H) input dtype
    x_f32 = x.astype(jnp.float32)
    ss = jnp.sum(x_f32 * x_f32, axis=-1, keepdims=True)    # (tm, 1) f32
    inv = jax.lax.rsqrt(ss / hidden + eps)                 # EUP rsqrt
    # Recompute the cast after the reduce: the full-tile f32 temporary need not
    # stay live across the cross-lane reduction (keeps VMEM pressure low).
    y = x.astype(jnp.float32) * inv
    w = w_ref[...]                                          # (1, H)
    if w.dtype in (jnp.float16, jnp.bfloat16):
        # torch casts the normalized activations to the weight dtype BEFORE the
        # multiply; keep that rounding order for parity.
        y = y.astype(w.dtype)
    o_ref[...] = (w * y).astype(o_ref.dtype)


def _pick_block_rows(rows, hidden, in_itemsize, out_itemsize, row_align, vmem_cap):
    """Large mem-bound tiles, VMEM-budgeted, >=4 grid steps when rows allow."""
    budget = vmem_cap // 2                    # 64 MiB on v5e/v6e, 32 MiB on v7x
    # Per row: double-buffered in + out tiles plus in-kernel f32 temporaries.
    per_row = hidden * (2 * (in_itemsize + out_itemsize) + 2 * 4)
    rows_by_budget = max(row_align, budget // per_row)
    # ~8 MiB of input per step keeps the ~0.35us per-step overhead negligible.
    rows_by_target = max(row_align, (8 * 1024 * 1024) // (hidden * in_itemsize))
    br = min(rows_by_budget, rows_by_target)
    br = max(row_align, (br // row_align) * row_align)
    # Never allocate a block taller than the (alignment-rounded) problem.
    br = min(br, _round_up(rows, row_align))
    # Keep >= 4 grid steps (2 per TensorCore on v7x) when rows allow, so the
    # "parallel" row axis gives each core overlapped pipeline work.
    if rows >= 4 * row_align:
        steps_cap = max(row_align, (pl.cdiv(rows, 4) // row_align) * row_align)
        br = min(br, steps_cap)
    return br


def rmsnorm(x, weight, eps=1e-6, *, block_rows=None):
    """x: (..., hidden); weight: (hidden,). Matches torch RMSNorm.forward."""
    hidden = x.shape[-1]
    orig_shape = x.shape
    x2d = x.reshape(-1, hidden)
    rows = x2d.shape[0]

    in_itemsize = x.dtype.itemsize
    w_itemsize = weight.dtype.itemsize

    # Output dtype follows torch promotion: weight * (f32 or weight-dtype) tensor.
    if weight.dtype in (jnp.float16, jnp.bfloat16):
        out_dtype = weight.dtype
    else:
        out_dtype = jnp.promote_types(weight.dtype, jnp.float32)
    out_itemsize = jnp.dtype(out_dtype).itemsize

    # Sub-32-bit dtypes pack rows along sublanes: keep row blocks densely packed.
    row_align = max(8, 32 // min(in_itemsize, out_itemsize))

    vmem_cap = _vmem_capacity_bytes()
    if block_rows is None:
        block_rows = _pick_block_rows(rows, hidden, in_itemsize, out_itemsize,
                                      row_align, vmem_cap)
    block_rows = max(row_align, _round_up(block_rows, row_align))

    # Partial last block is clipped by Pallas: garbage reads are row-local and
    # never written back, so no wrapper-side pad / slice is needed.
    grid = (pl.cdiv(rows, block_rows),)

    w2d = weight.reshape(1, hidden)

    # Double-buffered pipeline + f32 intermediates + invariant weight row, with
    # headroom, kept under physical VMEM.
    pipeline_bytes = (2 * block_rows * hidden * (in_itemsize + out_itemsize)
                      + 2 * block_rows * hidden * 4
                      + 2 * hidden * w_itemsize)
    vmem_limit = int(pipeline_bytes * 1.25) + (2 << 20)
    vmem_limit = max(vmem_limit, 16 << 20)
    vmem_limit = min(vmem_limit, vmem_cap - (4 << 20))

    out = pl.pallas_call(
        functools.partial(_rmsnorm_kernel, eps=eps, hidden=hidden),
        out_shape=jax.ShapeDtypeStruct((rows, hidden), out_dtype),
        grid_spec=pltpu.PrefetchScalarGridSpec(
            num_scalar_prefetch=0,
            grid=grid,
            in_specs=[
                # Last block dim equals the full array dim -> allowed for any
                # hidden; Mosaic masks the tail lanes of loads/stores itself.
                pl.BlockSpec((block_rows, hidden), lambda i: (i, 0)),
                # Weight is grid-invariant (constant index_map); tiny 1 x H row.
                pl.BlockSpec((1, hidden), lambda i: (0, 0)),
            ],
            out_specs=pl.BlockSpec((block_rows, hidden), lambda i: (i, 0)),
        ),
        compiler_params=pltpu.CompilerParams(
            dimension_semantics=("parallel",),
            vmem_limit_bytes=vmem_limit),
    )(x2d, w2d)

    return out.reshape(orig_shape)


def _reference_rmsnorm(x, weight, eps=1e-6):
    x_f32 = x.astype(jnp.float32)
    variance = jnp.mean(x_f32 * x_f32, axis=-1, keepdims=True)
    y = x.astype(jnp.float32) * jax.lax.rsqrt(variance + eps)
    if weight.dtype in (jnp.float16, jnp.bfloat16):
        y = y.astype(weight.dtype)
    return weight * y


if __name__ == "__main__":
    key = jax.random.PRNGKey(0)

    # Case 1: f32 activations, f32 weight (module default init = ones).
    batch, seq, hidden = 2, 8, 256
    x = jax.random.normal(key, (batch, seq, hidden), dtype=jnp.float32)
    weight = jnp.ones((hidden,), dtype=jnp.float32)
    out = jax.block_until_ready(rmsnorm(x, weight, eps=1e-6))
    ref = _reference_rmsnorm(x, weight, eps=1e-6)
    assert out.shape == ref.shape and out.dtype == ref.dtype
    assert jnp.allclose(out, ref, atol=1e-5, rtol=1e-5)

    # Case 2: bf16 activations + bf16 weight with awkward shapes — exercises the
    # non-128 hidden (160), the weight-dtype cast branch, and row counts that
    # don't divide the block size.
    k1, k2 = jax.random.split(key)
    x2 = jax.random.normal(k1, (3, 7, 160), dtype=jnp.bfloat16)
    w2 = (1.0 + 0.1 * jax.random.normal(k2, (160,), dtype=jnp.float32)
          ).astype(jnp.bfloat16)
    out2 = jax.block_until_ready(rmsnorm(x2, w2, eps=1e-6))
    ref2 = _reference_rmsnorm(x2, w2, eps=1e-6)
    assert out2.shape == ref2.shape and out2.dtype == ref2.dtype
    assert jnp.allclose(out2.astype(jnp.float32), ref2.astype(jnp.float32),
                        atol=2e-2, rtol=2e-2)

    # Case 3: force a multi-step grid with a clipped partial last row-block
    # (rows=21, block_rows=16 -> grid=2) to exercise the no-row-padding path.
    out3 = jax.block_until_ready(rmsnorm(x2, w2, eps=1e-6, block_rows=16))
    assert jnp.allclose(out3.astype(jnp.float32), ref2.astype(jnp.float32),
                        atol=2e-2, rtol=2e-2)

    print("KERNEL_OK")
</pallas_src>

<mosaic_0001>
module attributes {stable_mosaic.version = 11 : i64} {
  func.func @_rmsnorm_kernel(%arg0: i32, %arg1: memref<16x256xf32, #tpu.memory_space<vmem>>, %arg2: memref<1x256xf32, #tpu.memory_space<vmem>>, %arg3: memref<16x256xf32, #tpu.memory_space<vmem>>) attributes {dimension_semantics = [#tpu.dimension_semantics<parallel>], iteration_bounds = array<i64: 1>, scalar_prefetch = 0 : i64, scratch_operands = 0 : i64, tpu.core_type = #tpu.core_type<tc>, window_params = [{transform_indices = @transform_0, window_bounds = array<i64: 16, 256>}, {pipeline_mode = #tpu.pipeline_mode<synchronous>, transform_indices = @transform_1, window_bounds = array<i64: 1, 256>}, {transform_indices = @transform_2, window_bounds = array<i64: 16, 256>}]} {
    %c0 = arith.constant 0 : index
    %c0_0 = arith.constant 0 : index
    %0 = vector.load %arg1[%c0, %c0_0] : memref<16x256xf32, #tpu.memory_space<vmem>>, vector<16x256xf32>
    %1 = arith.mulf %0, %0 : vector<16x256xf32>
    %cst = arith.constant dense<0.000000e+00> : vector<16xf32>
    %2 = vector.multi_reduction <add>, %1, %cst [1] : vector<16x256xf32> to vector<16xf32>
    %3 = vector.shape_cast %2 : vector<16xf32> to vector<16x1xf32>
    %cst_1 = arith.constant 2.560000e+02 : f32
    %4 = vector.broadcast %cst_1 : f32 to vector<16x1xf32>
    %5 = arith.divf %3, %4 : vector<16x1xf32>
    %cst_2 = arith.constant 9.99999997E-7 : f32
    %6 = vector.broadcast %cst_2 : f32 to vector<16x1xf32>
    %7 = arith.addf %5, %6 : vector<16x1xf32>
    %8 = math.rsqrt %7 : vector<16x1xf32>
    %9 = vector.broadcast %8 : vector<16x1xf32> to vector<16x256xf32>
    %10 = arith.mulf %0, %9 : vector<16x256xf32>
    %c0_3 = arith.constant 0 : index
    %c0_4 = arith.constant 0 : index
    %11 = vector.load %arg2[%c0_3, %c0_4] : memref<1x256xf32, #tpu.memory_space<vmem>>, vector<1x256xf32>
    %12 = vector.broadcast %11 : vector<1x256xf32> to vector<16x256xf32>
    %13 = arith.mulf %12, %10 : vector<16x256xf32>
    %c0_5 = arith.constant 0 : index
    %c0_6 = arith.constant 0 : index
    %14 = vector.load %arg3[%c0_5, %c0_6] : memref<16x256xf32, #tpu.memory_space<vmem>>, vector<16x256xf32>
    tpu.vector_store %arg3[%c0_5, %c0_6], %13 {strides = array<i32>} : memref<16x256xf32, #tpu.memory_space<vmem>>, vector<16x256xf32>,
    return
  }
  func.func @transform_0(%arg0: i32) -> (i32, i32) {
    %c0_i32 = arith.constant 0 : i32
    %c0_i32_0 = arith.constant 0 : i32
    return %arg0, %c0_i32 : i32, i32
  }
  func.func @transform_1(%arg0: i32) -> (i32, i32) {
    %c0_i32 = arith.constant 0 : i32
    %c0_i32_0 = arith.constant 0 : i32
    %c0_i32_1 = arith.constant 0 : i32
    return %c0_i32, %c0_i32_0 : i32, i32
  }
  func.func @transform_2(%arg0: i32) -> (i32, i32) {
    %c0_i32 = arith.constant 0 : i32
    %c0_i32_0 = arith.constant 0 : i32
    return %arg0, %c0_i32 : i32, i32
  }
}

</mosaic_0001>

<llo_original>
// kernel: tpu_custom_call.1
$region0: #{tpu_custom_call.1}
  #allocation0 [shape = 'u32[]', space=smem, size = 0x4, offset = 0x4, fixed_abs, tag = 'smem constant byte address 0x4 - core index']
  #allocation1 [shape = 'u32[72,128]{1,0:T(1,128)}', space=vmem, size = 0x9000, scoped, tag = 'internal scratch']
  %s0 = inlined_call_operand.hbm [shape: f32[16,256], index: 0, kind: input, shape index: {}]
  %s1 = inlined_call_operand.hbm [shape: f32[1,256], index: 1, kind: input, shape index: {}]
  %s2 = inlined_call_operand.hbm [shape: f32[16,256], index: 2, kind: output, shape index: {}]
  %s3 = sld [smem:[#allocation0]]
  $region26: #{tpu_custom_call.1} parent=0
    _
  %s5 = ssub.s32 1, %s3
  %s6 = scalar_select 0, %s5, %s3
  $region1: #{tpu_custom_call.1} parent=0
    #allocation2 [shape = 'u8[16384]{0}', space=vmem, size = 0x4000, scoped, tag = 'input window, operand 0, single buffered']
    #allocation3 [shape = 's32[1]{0}', space=sflag, size = 0x4, scoped, tag = 'scoped memory for tpu_custom_call.1']
    #allocation4 [shape = 's32[1]{0}', space=sflag, size = 0x4, scoped, tag = 'scoped memory for tpu_custom_call.1']
    #allocation5 [shape = 'u8[1024]{0}', space=vmem, size = 0x400, scoped, tag = 'input window, operand 1, single buffered']
    #allocation6 [shape = 's32[1]{0}', space=sflag, size = 0x4, scoped, tag = 'scoped memory for tpu_custom_call.1']
    #allocation7 [shape = 'u8[16384]{0}', space=vmem, size = 0x4000, scoped, tag = 'output window, operand 0, single buffered']
    %7 = vsyncpa [#allocation3], 0
    %8 = vsyncpa [#allocation6], 0
    %9 = vsyncpa [#allocation4], 0
    // Predicated region
    $region2: #{tpu_custom_call.1} parent=1 // pred_check
      _
    $region3: #{tpu_custom_call.1} parent=1 // pred_check_branch
      %11 = sbr.rel (0) target = $region5
    $region4: #{tpu_custom_call.1} parent=1 // pred_region
      %13 = vsyncadd [#allocation3], 0
      %s14 = sshll.u32 %s0, 4
      %s15 = int_to_ptr.hbm [resolvable:$true] %s14
      %s16 = sshll.u32 [#allocation2], 4
      %s17 = int_to_ptr.vmem [resolvable:$true] %s16
      %22 = dma.hbm_to_vmem [thread:$0]  %s15, 512, %s17, [#allocation3], 256, 256, 16
    $region5: #{tpu_custom_call.1} parent=1 // pred_fallthru
      _
    // Predicated region
    $region6: #{tpu_custom_call.1} parent=1 // pred_check
      _
    $region7: #{tpu_custom_call.1} parent=1 // pred_check_branch
      %24 = sbr.rel (0) target = $region9
    $region8: #{tpu_custom_call.1} parent=1 // pred_region
      %26 = vsyncadd [#allocation6], 0
      %s28 = sshll.u32 %s1, 4
      %s29 = int_to_ptr.hbm [resolvable:$true] %s28
      %s30 = sshll.u32 [#allocation5], 4
      %s31 = int_to_ptr.vmem [resolvable:$true] %s30
      %33 = dma.hbm_to_vmem [thread:$0]  %s29, 32, %s31, [#allocation6]
    $region9: #{tpu_custom_call.1} parent=1 // pred_fallthru
      _
    // Predicated region
    $region10: #{tpu_custom_call.1} parent=1 // pred_check
      _
    $region11: #{tpu_custom_call.1} parent=1 // pred_check_branch
      %35 = sbr.rel (0) target = $region13
    $region12: #{tpu_custom_call.1} parent=1 // pred_region
      %37 = dma.done [#allocation3], 512
    $region13: #{tpu_custom_call.1} parent=1 // pred_fallthru
      _
    // Predicated region
    $region14: #{tpu_custom_call.1} parent=1 // pred_check
      _
    $region15: #{tpu_custom_call.1} parent=1 // pred_check_branch
      %39 = sbr.rel (0) target = $region17
    $region16: #{tpu_custom_call.1} parent=1 // pred_region
      %41 = dma.done [#allocation6], 32
    $region17: #{tpu_custom_call.1} parent=1 // pred_fallthru
      _
    %v42 = vld [vmem:[#allocation2] sm:$0xff]
    %v43 = vld [vmem:[#allocation2 + $0x8] sm:$0xff]
    %v44 = vld [vmem:[#allocation2 + $0x10] sm:$0xff]
    %v45 = vld [vmem:[#allocation2 + $0x18] sm:$0xff]
    %v46 = vmul.f32 %v42, %v42
    %v47 = vmul.f32 %v43, %v43
    %v48 = vmul.f32 %v44, %v44
    %v49 = vmul.f32 %v45, %v45
    %v50 = vadd.f32 %v46, %v47
    %51 = vadd.xlane.f32.xlu0 %v50
    %v52 = vpop.xlane.xlu0 %51
    %v53 = vadd.f32 %v48, %v49
    %54 = vadd.xlane.f32.xlu0 %v53
    %v55 = vpop.xlane.xlu0 %54
    %v56 = vrcp.pop 256.0
    %v57 = vmul.f32 256.0, %v56
    %v58 = vsub.f32 1.0, %v57
    %v59 = vmul.f32 %v56, %v58
    %v60 = vadd.f32 %v56, %v59
    %vm61 = vweird.f32 %v56
    %v62 = vsel %vm61, %v56, %v60
    %v63 = vmul.f32 %v52, %v62
    %v64 = vmul.f32 %v55, %v62
    %v65 = vadd.f32 %v63, 1e-06
    %v66 = vadd.f32 %v64, 1e-06
    %v67 = vrsqrt.pop %v65
    %v68 = vmul.f32 %v67, %v65
    %v69 = vmul.f32 %v68, %v67
    %v70 = vmul.f32 0.5, %v69
    %v71 = vsub.f32 1.5, %v70
    %v72 = vmul.f32 %v67, %v71
    %vm73 = vweird.f32 %v65
    %vm74 = vweird.f32 %v67
    %vm75 = vmor %vm73, %vm74
    %v76 = vsel %vm75, %v67, %v72
    %v77 = vrsqrt.pop %v66
    %v78 = vmul.f32 %v77, %v66
    %v79 = vmul.f32 %v78, %v77
    %v80 = vmul.f32 0.5, %v79
    %v81 = vsub.f32 1.5, %v80
    %v82 = vmul.f32 %v77, %v81
    %vm83 = vweird.f32 %v66
    %vm84 = vweird.f32 %v77
    %vm85 = vmor %vm83, %vm84
    %v86 = vsel %vm85, %v77, %v82
    %v87 = vmul.f32 %v42, %v76
    %v88 = vmul.f32 %v43, %v76
    %v89 = vmul.f32 %v44, %v86
    %v90 = vmul.f32 %v45, %v86
    %v91 = vld [vmem:[#allocation5] sm:$0x3]
    %v93 = vperm.slane %v91, 0
    %v94 = vperm.slane %v91, 1
    %v97 = vmul.f32 %v93, %v87
    %v98 = vmul.f32 %v94, %v88
    %v99 = vmul.f32 %v93, %v89
    %v100 = vmul.f32 %v94, %v90
    %101 = vst [vmem:[#allocation7] sm:$0xff] %v97
    %102 = vst [vmem:[#allocation7 + $0x8] sm:$0xff] %v98
    %103 = vst [vmem:[#allocation7 + $0x10] sm:$0xff] %v99
    %104 = vst [vmem:[#allocation7 + $0x18] sm:$0xff] %v100
    // Predicated region
    $region18: #{tpu_custom_call.1} parent=1 // pred_check
      _
    $region19: #{tpu_custom_call.1} parent=1 // pred_check_branch
      %106 = sbr.rel (0) target = $region21
    $region20: #{tpu_custom_call.1} parent=1 // pred_region
      %108 = vsyncadd [#allocation4], 0
      %s109 = sshll.u32 [#allocation7], 4
      %s110 = int_to_ptr.vmem [resolvable:$true] %s109
      %s111 = sshll.u32 %s2, 4
      %s112 = int_to_ptr.hbm [resolvable:$true] %s111
      %117 = dma.vmem_to_hbm [thread:$0]  %s110, 512, %s112, [#allocation4], 256, 256, 16
    $region21: #{tpu_custom_call.1} parent=1 // pred_fallthru
      _
    // Predicated region
    $region22: #{tpu_custom_call.1} parent=1 // pred_check
      _
    $region23: #{tpu_custom_call.1} parent=1 // pred_check_branch
      %119 = sbr.rel (0) target = $region25
    $region24: #{tpu_custom_call.1} parent=1 // pred_region
      %121 = dma.done [#allocation4], 512
    $region25: #{tpu_custom_call.1} parent=1 // pred_fallthru
      _
    %122 = vsyncpa [#allocation3], 1
    %123 = vsyncpa [#allocation6], 1
    %124 = vsyncpa [#allocation4], 1

</llo_original>
